<compile_context>
chip_gen: v5e
topology: v5e:2x2
jax: 0.10.0
libtpu: 0.0.40
codegen_flags: <defaults>
</compile_context>

<pallas_src>
import jax
import jax.numpy as jnp
from jax.experimental import pallas as pl
from jax.experimental.pallas import tpu as pltpu

NUM_CLASSES = 10
PADDED_CLASSES = 128          # lane-dense output store + full MXU tile for layer 3
TM_MAX = 2048                 # batch tile (fits the explicit 48 MiB VMEM budget)
NEG_INF_BIAS = -1e30          # padded-class bias -> exp() == 0 in log_softmax
VMEM_LIMIT_BYTES = 48 * 1024 * 1024


def _round_up(n, m):
    return ((n + m - 1) // m) * m


def mnist_mlp_kernel(x_ref, w1_ref, b1_ref, w2_ref, b2_ref, w3_ref, b3_ref, o_ref):
    # x_ref: (TM, 784) f32; w1: (784,128) bf16; w2: (128,256) bf16;
    # w3: (256,128) bf16 (zero-padded cols 10..127); biases f32 (1, N);
    # o_ref: (TM, 128) bf16 log-probs (cols 10..127 are junk, sliced off outside).
    x = x_ref[...].astype(jnp.bfloat16)   # cast in-kernel: no separate HBM cast pass

    # layer1 + relu (f32 MXU accumulate, back to bf16 for the next MXU pass)
    h1 = jnp.dot(x, w1_ref[...], preferred_element_type=jnp.float32) + b1_ref[...]
    h1 = jnp.maximum(h1, 0.0).astype(jnp.bfloat16)

    # layer2 + relu
    h2 = jnp.dot(h1, w2_ref[...], preferred_element_type=jnp.float32) + b2_ref[...]
    h2 = jnp.maximum(h2, 0.0).astype(jnp.bfloat16)

    # layer3 (logits over 128 padded classes; padded lanes sit at ~-1e30)
    logits = jnp.dot(h2, w3_ref[...], preferred_element_type=jnp.float32) + b3_ref[...]

    # numerically stable log_softmax over the class axis (padded lanes exp to 0)
    m = jnp.max(logits, axis=-1, keepdims=True)
    shifted = logits - m
    lse = jnp.log(jnp.sum(jnp.exp(shifted), axis=-1, keepdims=True))
    o_ref[...] = (shifted - lse).astype(o_ref.dtype)


def standard_mnist_forward(x_nchw, params):
    """x_nchw: (B, C, H, W) float32 with C*H*W == 784. Returns (B, 10) log-probs (bf16)."""
    w1, b1, w2, b2, w3, b3 = params
    B = x_nchw.shape[0]
    K = 28 * 28
    x = x_nchw.reshape(B, K).astype(jnp.float32)   # reshape is free; no bf16 cast pass

    # --- class-dim padding for a lane-dense (TM, 128) output store
    pad_c = PADDED_CLASSES - NUM_CLASSES
    w3p = jnp.pad(w3, ((0, 0), (0, pad_c))).astype(jnp.bfloat16)
    b3p = jnp.pad(b3.astype(jnp.float32), ((0, 0), (0, pad_c)),
                  constant_values=NEG_INF_BIAS)
    w1b = w1.astype(jnp.bfloat16)
    w2b = w2.astype(jnp.bfloat16)
    b1f = b1.astype(jnp.float32)
    b2f = b2.astype(jnp.float32)

    # --- batch tile: big tiles for HBM efficiency, but keep >= 2 grid programs
    # when the batch is splittable so v7x's two TensorCores both get work.
    tm = min(TM_MAX, _round_up(B, 8))
    if B > 16:
        tm = min(tm, _round_up(pl.cdiv(B, 2), 8))
    grid = (pl.cdiv(B, tm),)   # ragged last block is masked by Pallas; no jnp.pad

    # x / output tiles march with the batch program id; weights & biases are
    # grid-invariant (constant index_map) -> resident in VMEM across all steps.
    x_spec = pl.BlockSpec((tm, K), lambda i: (i, 0))
    out_spec = pl.BlockSpec((tm, PADDED_CLASSES), lambda i: (i, 0))
    resident = lambda shape: pl.BlockSpec(shape, lambda i: (0, 0))

    weight_bytes = ((w1b.size + w2b.size + w3p.size) * 2
                    + (b1f.size + b2f.size + b3p.size) * 4)
    cost = pl.CostEstimate(
        flops=2 * B * (K * 128 + 128 * 256 + 256 * PADDED_CLASSES),
        transcendentals=B * (PADDED_CLASSES + 1),
        bytes_accessed=B * K * 4 + weight_bytes + B * PADDED_CLASSES * 2,
    )

    out = pl.pallas_call(
        mnist_mlp_kernel,
        out_shape=jax.ShapeDtypeStruct((B, PADDED_CLASSES), jnp.bfloat16),
        grid=grid,
        in_specs=[
            x_spec,
            resident(w1b.shape), resident(b1f.shape),
            resident(w2b.shape), resident(b2f.shape),
            resident(w3p.shape), resident(b3p.shape),
        ],
        out_specs=out_spec,
        compiler_params=pltpu.CompilerParams(
            dimension_semantics=("parallel",),
            vmem_limit_bytes=VMEM_LIMIT_BYTES,
        ),
        cost_estimate=cost,
    )(x, w1b, b1f, w2b, b2f, w3p, b3p)

    return out[:, :NUM_CLASSES]


def init_params(key):
    """Deterministic init mimicking torch.nn.Linear default (uniform +/- 1/sqrt(fan_in)).
    Weights are stored as (in_features, out_features)."""
    dims = [(28 * 28, 128), (128, 256), (256, 10)]
    params = []
    for i, (fan_in, fan_out) in enumerate(dims):
        kw, kb = jax.random.split(jax.random.fold_in(key, i))
        bound = 1.0 / (fan_in ** 0.5)
        w = jax.random.uniform(kw, (fan_in, fan_out), jnp.float32, -bound, bound)
        b = jax.random.uniform(kb, (1, fan_out), jnp.float32, -bound, bound)
        params.extend([w, b])
    return tuple(params)


def reference_forward(x_nchw, params):
    """Pure-JAX f32 reference of the PyTorch module."""
    w1, b1, w2, b2, w3, b3 = params
    x = x_nchw.reshape(x_nchw.shape[0], -1).astype(jnp.float32)
    h1 = jnp.maximum(x @ w1 + b1, 0.0)
    h2 = jnp.maximum(h1 @ w2 + b2, 0.0)
    logits = h2 @ w3 + b3
    return jax.nn.log_softmax(logits, axis=-1)


if __name__ == "__main__":
    key = jax.random.PRNGKey(0)
    params = init_params(key)

    # Small, MNIST-consistent input: batch=2, channels=1, 28x28 (flattens to 784).
    x = jax.random.normal(jax.random.fold_in(key, 100), (2, 1, 28, 28), jnp.float32)

    out = standard_mnist_forward(x, params)
    out = jax.block_until_ready(out)

    assert out.shape == (2, 10)
    out_f32 = out.astype(jnp.float32)
    # log_softmax rows should exp-sum to ~1 (bf16 output -> slightly looser tol)
    row_sums = jnp.exp(out_f32).sum(axis=1)
    assert bool(jnp.all(jnp.abs(row_sums - 1.0) < 2e-2))
    # match the f32 reference within bf16 tolerance
    ref = reference_forward(x, params)
    assert bool(jnp.all(jnp.abs(out_f32 - ref) < 0.1))

    print("KERNEL_OK")
</pallas_src>

<mosaic_0001>
module attributes {stable_mosaic.version = 11 : i64} {
  func.func @mnist_mlp_kernel(%arg0: i32, %arg1: memref<8x784xf32, #tpu.memory_space<vmem>>, %arg2: memref<784x128xbf16, #tpu.memory_space<vmem>>, %arg3: memref<1x128xf32, #tpu.memory_space<vmem>>, %arg4: memref<128x256xbf16, #tpu.memory_space<vmem>>, %arg5: memref<1x256xf32, #tpu.memory_space<vmem>>, %arg6: memref<256x128xbf16, #tpu.memory_space<vmem>>, %arg7: memref<1x128xf32, #tpu.memory_space<vmem>>, %arg8: memref<8x128xbf16, #tpu.memory_space<vmem>>) attributes {dimension_semantics = [#tpu.dimension_semantics<parallel>], iteration_bounds = array<i64: 1>, scalar_prefetch = 0 : i64, scratch_operands = 0 : i64, tpu.core_type = #tpu.core_type<tc>, window_params = [{transform_indices = @transform_0, window_bounds = array<i64: 8, 784>}, {pipeline_mode = #tpu.pipeline_mode<synchronous>, transform_indices = @transform_1, window_bounds = array<i64: 784, 128>}, {pipeline_mode = #tpu.pipeline_mode<synchronous>, transform_indices = @transform_2, window_bounds = array<i64: 1, 128>}, {pipeline_mode = #tpu.pipeline_mode<synchronous>, transform_indices = @transform_3, window_bounds = array<i64: 128, 256>}, {pipeline_mode = #tpu.pipeline_mode<synchronous>, transform_indices = @transform_4, window_bounds = array<i64: 1, 256>}, {pipeline_mode = #tpu.pipeline_mode<synchronous>, transform_indices = @transform_5, window_bounds = array<i64: 256, 128>}, {pipeline_mode = #tpu.pipeline_mode<synchronous>, transform_indices = @transform_6, window_bounds = array<i64: 1, 128>}, {transform_indices = @transform_7, window_bounds = array<i64: 8, 128>}]} {
    %c0 = arith.constant 0 : index
    %c0_0 = arith.constant 0 : index
    %0 = vector.load %arg1[%c0, %c0_0] : memref<8x784xf32, #tpu.memory_space<vmem>>, vector<8x784xf32>
    %1 = arith.truncf %0 : vector<8x784xf32> to vector<8x784xbf16>
    %c0_1 = arith.constant 0 : index
    %c0_2 = arith.constant 0 : index
    %2 = vector.load %arg2[%c0_1, %c0_2] : memref<784x128xbf16, #tpu.memory_space<vmem>>, vector<784x128xbf16>
    %cst = arith.constant dense<0.000000e+00> : vector<8x128xf32>
    %3 = tpu.matmul %1, %2, %cst {dimension_numbers = #tpu.dot_dimension_numbers<[1], [0], [0], [1], [0, 0, 1, 1], [], []>} : vector<8x784xbf16>, vector<784x128xbf16>, vector<8x128xf32> -> vector<8x128xf32>
    %c0_3 = arith.constant 0 : index
    %c0_4 = arith.constant 0 : index
    %4 = vector.load %arg3[%c0_3, %c0_4] : memref<1x128xf32, #tpu.memory_space<vmem>>, vector<1x128xf32>
    %5 = vector.broadcast %4 : vector<1x128xf32> to vector<8x128xf32>
    %6 = arith.addf %3, %5 : vector<8x128xf32>
    %cst_5 = arith.constant 0.000000e+00 : f32
    %7 = vector.broadcast %cst_5 : f32 to vector<8x128xf32>
    %8 = arith.maximumf %6, %7 : vector<8x128xf32>
    %9 = arith.truncf %8 : vector<8x128xf32> to vector<8x128xbf16>
    %c0_6 = arith.constant 0 : index
    %c0_7 = arith.constant 0 : index
    %10 = vector.load %arg4[%c0_6, %c0_7] : memref<128x256xbf16, #tpu.memory_space<vmem>>, vector<128x256xbf16>
    %cst_8 = arith.constant dense<0.000000e+00> : vector<8x256xf32>
    %11 = tpu.matmul %9, %10, %cst_8 {dimension_numbers = #tpu.dot_dimension_numbers<[1], [0], [0], [1], [0, 0, 1, 1], [], []>} : vector<8x128xbf16>, vector<128x256xbf16>, vector<8x256xf32> -> vector<8x256xf32>
    %c0_9 = arith.constant 0 : index
    %c0_10 = arith.constant 0 : index
    %12 = vector.load %arg5[%c0_9, %c0_10] : memref<1x256xf32, #tpu.memory_space<vmem>>, vector<1x256xf32>
    %13 = vector.broadcast %12 : vector<1x256xf32> to vector<8x256xf32>
    %14 = arith.addf %11, %13 : vector<8x256xf32>
    %cst_11 = arith.constant 0.000000e+00 : f32
    %15 = vector.broadcast %cst_11 : f32 to vector<8x256xf32>
    %16 = arith.maximumf %14, %15 : vector<8x256xf32>
    %17 = arith.truncf %16 : vector<8x256xf32> to vector<8x256xbf16>
    %c0_12 = arith.constant 0 : index
    %c0_13 = arith.constant 0 : index
    %18 = vector.load %arg6[%c0_12, %c0_13] : memref<256x128xbf16, #tpu.memory_space<vmem>>, vector<256x128xbf16>
    %cst_14 = arith.constant dense<0.000000e+00> : vector<8x128xf32>
    %19 = tpu.matmul %17, %18, %cst_14 {dimension_numbers = #tpu.dot_dimension_numbers<[1], [0], [0], [1], [0, 0, 1, 1], [], []>} : vector<8x256xbf16>, vector<256x128xbf16>, vector<8x128xf32> -> vector<8x128xf32>
    %c0_15 = arith.constant 0 : index
    %c0_16 = arith.constant 0 : index
    %20 = vector.load %arg7[%c0_15, %c0_16] : memref<1x128xf32, #tpu.memory_space<vmem>>, vector<1x128xf32>
    %21 = vector.broadcast %20 : vector<1x128xf32> to vector<8x128xf32>
    %22 = arith.addf %19, %21 : vector<8x128xf32>
    %cst_17 = arith.constant dense<0xFF800000> : vector<8xf32>
    %23 = vector.multi_reduction <maximumf>, %22, %cst_17 [1] : vector<8x128xf32> to vector<8xf32>
    %24 = vector.shape_cast %23 : vector<8xf32> to vector<8x1xf32>
    %25 = vector.broadcast %24 : vector<8x1xf32> to vector<8x128xf32>
    %26 = arith.subf %22, %25 : vector<8x128xf32>
    %27 = math.exp %26 : vector<8x128xf32>
    %cst_18 = arith.constant dense<0.000000e+00> : vector<8xf32>
    %28 = vector.multi_reduction <add>, %27, %cst_18 [1] : vector<8x128xf32> to vector<8xf32>
    %29 = vector.shape_cast %28 : vector<8xf32> to vector<8x1xf32>
    %30 = math.log %29 : vector<8x1xf32>
    %31 = vector.broadcast %30 : vector<8x1xf32> to vector<8x128xf32>
    %32 = arith.subf %26, %31 : vector<8x128xf32>
    %33 = arith.truncf %32 : vector<8x128xf32> to vector<8x128xbf16>
    %c0_19 = arith.constant 0 : index
    %c0_20 = arith.constant 0 : index
    %34 = vector.load %arg8[%c0_19, %c0_20] : memref<8x128xbf16, #tpu.memory_space<vmem>>, vector<8x128xbf16>
    tpu.vector_store %arg8[%c0_19, %c0_20], %33 {strides = array<i32>} : memref<8x128xbf16, #tpu.memory_space<vmem>>, vector<8x128xbf16>,
    return
  }
  func.func @transform_0(%arg0: i32) -> (i32, i32) {
    %c0_i32 = arith.constant 0 : i32
    %c0_i32_0 = arith.constant 0 : i32
    return %arg0, %c0_i32 : i32, i32
  }
  func.func @transform_1(%arg0: i32) -> (i32, i32) {
    %c0_i32 = arith.constant 0 : i32
    %c0_i32_0 = arith.constant 0 : i32
    %c0_i32_1 = arith.constant 0 : i32
    return %c0_i32, %c0_i32_0 : i32, i32
  }
  func.func @transform_2(%arg0: i32) -> (i32, i32) {
    %c0_i32 = arith.constant 0 : i32
    %c0_i32_0 = arith.constant 0 : i32
    %c0_i32_1 = arith.constant 0 : i32
    return %c0_i32, %c0_i32_0 : i32, i32
  }
  func.func @transform_3(%arg0: i32) -> (i32, i32) {
    %c0_i32 = arith.constant 0 : i32
    %c0_i32_0 = arith.constant 0 : i32
    %c0_i32_1 = arith.constant 0 : i32
    return %c0_i32, %c0_i32_0 : i32, i32
  }
  func.func @transform_4(%arg0: i32) -> (i32, i32) {
    %c0_i32 = arith.constant 0 : i32
    %c0_i32_0 = arith.constant 0 : i32
    %c0_i32_1 = arith.constant 0 : i32
    return %c0_i32, %c0_i32_0 : i32, i32
  }
  func.func @transform_5(%arg0: i32) -> (i32, i32) {
    %c0_i32 = arith.constant 0 : i32
    %c0_i32_0 = arith.constant 0 : i32
    %c0_i32_1 = arith.constant 0 : i32
    return %c0_i32, %c0_i32_0 : i32, i32
  }
  func.func @transform_6(%arg0: i32) -> (i32, i32) {
    %c0_i32 = arith.constant 0 : i32
    %c0_i32_0 = arith.constant 0 : i32
    %c0_i32_1 = arith.constant 0 : i32
    return %c0_i32, %c0_i32_0 : i32, i32
  }
  func.func @transform_7(%arg0: i32) -> (i32, i32) {
    %c0_i32 = arith.constant 0 : i32
    %c0_i32_0 = arith.constant 0 : i32
    return %arg0, %c0_i32 : i32, i32
  }
}

</mosaic_0001>

<llo_original>
// kernel: tpu_custom_call.1
$region0: #{tpu_custom_call.1}
  #allocation0 [shape = 'u32[]', space=smem, size = 0x4, offset = 0x4, fixed_abs, tag = 'smem constant byte address 0x4 - core index']
  #allocation1 [shape = 'u32[72,128]{1,0:T(1,128)}', space=vmem, size = 0x9000, scoped, tag = 'internal scratch']
  %s0 = inlined_call_operand.hbm [shape: f32[2,784], index: 0, kind: input, shape index: {}]
  %s1 = inlined_call_operand.hbm [shape: bf16[784,128], index: 1, kind: input, shape index: {}]
  %s2 = inlined_call_operand.vmem [shape: f32[1,128], index: 2, kind: input, shape index: {}]
  %s3 = inlined_call_operand.hbm [shape: bf16[128,256], index: 3, kind: input, shape index: {}]
  %s4 = inlined_call_operand.vmem [shape: f32[1,256], index: 4, kind: input, shape index: {}]
  %s5 = inlined_call_operand.hbm [shape: bf16[256,128], index: 5, kind: input, shape index: {}]
  %s6 = inlined_call_operand.vmem [shape: f32[1,128], index: 6, kind: input, shape index: {}]
  %s7 = inlined_call_operand.hbm [shape: bf16[2,128], index: 7, kind: output, shape index: {}]
  %s8 = sld [smem:[#allocation0]]
  $region54: #{tpu_custom_call.1} parent=0
    _
  %s10 = ssub.s32 1, %s8
  %s11 = scalar_select 0, %s10, %s8
  $region1: #{tpu_custom_call.1} parent=0
    #allocation2 [shape = 'u8[28672]{0}', space=vmem, size = 0x7000, scoped, tag = 'input window, operand 0, single buffered']
    #allocation3 [shape = 's32[1]{0}', space=sflag, size = 0x4, scoped, tag = 'scoped memory for tpu_custom_call.1']
    #allocation4 [shape = 's32[1]{0}', space=sflag, size = 0x4, scoped, tag = 'scoped memory for tpu_custom_call.1']
    #allocation5 [shape = 'u8[200704]{0}', space=vmem, size = 0x31000, scoped, tag = 'input window, operand 1, single buffered']
    #allocation6 [shape = 's32[1]{0}', space=sflag, size = 0x4, scoped, tag = 'scoped memory for tpu_custom_call.1']
    #allocation7 [shape = 'u8[65536]{0}', space=vmem, size = 0x10000, scoped, tag = 'input window, operand 3, single buffered']
    #allocation8 [shape = 'u8[65536]{0}', space=vmem, size = 0x10000, scoped, tag = 'input window, operand 5, single buffered']
    #allocation9 [shape = 's32[1]{0}', space=sflag, size = 0x4, scoped, tag = 'scoped memory for tpu_custom_call.1']
    #allocation10 [shape = 'u8[2048]{0}', space=vmem, size = 0x800, scoped, tag = 'output window, operand 0, single buffered']
    %12 = vsyncpa [#allocation3], 0
    %13 = vsyncpa [#allocation6], 0
    %14 = vsyncpa [#allocation9], 0
    %15 = vsyncpa [#allocation4], 0
    // Predicated region
    $region2: #{tpu_custom_call.1} parent=1 // pred_check
      _
    $region3: #{tpu_custom_call.1} parent=1 // pred_check_branch
      %17 = sbr.rel (0) target = $region5
    $region4: #{tpu_custom_call.1} parent=1 // pred_region
      %19 = vsyncadd [#allocation3], 672
      %s20 = sshll.u32 %s0, 4
      %s21 = int_to_ptr.hbm [resolvable:$true] %s20
      %s22 = sshll.u32 [#allocation2], 4
      %s23 = int_to_ptr.vmem [resolvable:$true] %s22
      %28 = dma.hbm_to_vmem [thread:$0]  %s21, 224, %s23, [#allocation3], 224, 224, 14
    $region5: #{tpu_custom_call.1} parent=1 // pred_fallthru
      _
    // Predicated region
    $region6: #{tpu_custom_call.1} parent=1 // pred_check
      _
    $region7: #{tpu_custom_call.1} parent=1 // pred_check_branch
      %30 = sbr.rel (0) target = $region9
    $region8: #{tpu_custom_call.1} parent=1 // pred_region
      %32 = vsyncadd [#allocation6], 0
      %s33 = sshll.u32 %s1, 4
      %s34 = int_to_ptr.hbm [resolvable:$true] %s33
      %s35 = sshll.u32 [#allocation5], 4
      %s36 = int_to_ptr.vmem [resolvable:$true] %s35
      %41 = dma.hbm_to_vmem [thread:$0]  %s34, 6272, %s36, [#allocation6], 64, 64, 4
    $region9: #{tpu_custom_call.1} parent=1 // pred_fallthru
      _
    // Predicated region
    $region10: #{tpu_custom_call.1} parent=1 // pred_check
      _
    $region11: #{tpu_custom_call.1} parent=1 // pred_check_branch
      %43 = sbr.rel (0) target = $region13
    $region12: #{tpu_custom_call.1} parent=1 // pred_region
      _
    $region13: #{tpu_custom_call.1} parent=1 // pred_fallthru
      _
    // Predicated region
    $region14: #{tpu_custom_call.1} parent=1 // pred_check
      _
    $region15: #{tpu_custom_call.1} parent=1 // pred_check_branch
      %45 = sbr.rel (0) target = $region17
    $region16: #{tpu_custom_call.1} parent=1 // pred_region
      %47 = vsyncadd [#allocation6], 0
      %s48 = sshll.u32 %s3, 4
      %s49 = int_to_ptr.hbm [resolvable:$true] %s48
      %s50 = sshll.u32 [#allocation7], 4
      %s51 = int_to_ptr.vmem [resolvable:$true] %s50
      %56 = dma.hbm_to_vmem [thread:$0]  %s49, 2048, %s51, [#allocation6], 128, 128, 8
    $region17: #{tpu_custom_call.1} parent=1 // pred_fallthru
      _
    // Predicated region
    $region18: #{tpu_custom_call.1} parent=1 // pred_check
      _
    $region19: #{tpu_custom_call.1} parent=1 // pred_check_branch
      %58 = sbr.rel (0) target = $region21
    $region20: #{tpu_custom_call.1} parent=1 // pred_region
      _
    $region21: #{tpu_custom_call.1} parent=1 // pred_fallthru
      _
    // Predicated region
    $region22: #{tpu_custom_call.1} parent=1 // pred_check
      _
    $region23: #{tpu_custom_call.1} parent=1 // pred_check_branch
      %60 = sbr.rel (0) target = $region25
    $region24: #{tpu_custom_call.1} parent=1 // pred_region
      %62 = vsyncadd [#allocation9], 0
      %s63 = sshll.u32 %s5, 4
      %s64 = int_to_ptr.hbm [resolvable:$true] %s63
      %s65 = sshll.u32 [#allocation8], 4
      %s66 = int_to_ptr.vmem [resolvable:$true] %s65
      %71 = dma.hbm_to_vmem [thread:$0]  %s64, 2048, %s66, [#allocation9], 64, 64, 4
    $region25: #{tpu_custom_call.1} parent=1 // pred_fallthru
      _
    // Predicated region
    $region26: #{tpu_custom_call.1} parent=1 // pred_check
      _
    $region27: #{tpu_custom_call.1} parent=1 // pred_check_branch
      %73 = sbr.rel (0) target = $region29
    $region28: #{tpu_custom_call.1} parent=1 // pred_region
      _
    $region29: #{tpu_custom_call.1} parent=1 // pred_fallthru
      _
    // Predicated region
    $region30: #{tpu_custom_call.1} parent=1 // pred_check
      _
    $region31: #{tpu_custom_call.1} parent=1 // pred_check_branch
      %75 = sbr.rel (0) target = $region33
    $region32: #{tpu_custom_call.1} parent=1 // pred_region
      %77 = dma.done [#allocation3], 896
    $region33: #{tpu_custom_call.1} parent=1 // pred_fallthru
      _
    // Predicated region
    $region34: #{tpu_custom_call.1} parent=1 // pred_check
      _
    $region35: #{tpu_custom_call.1} parent=1 // pred_check_branch
      %79 = sbr.rel (0) target = $region37
    $region36: #{tpu_custom_call.1} parent=1 // pred_region
      %81 = dma.done [#allocation6], 6272
    $region37: #{tpu_custom_call.1} parent=1 // pred_fallthru
      _
    // Predicated region
    $region38: #{tpu_custom_call.1} parent=1 // pred_check
      _
    $region39: #{tpu_custom_call.1} parent=1 // pred_check_branch
      %83 = sbr.rel (0) target = $region41
    $region40: #{tpu_custom_call.1} parent=1 // pred_region
      %85 = dma.done [#allocation6], 2048
    $region41: #{tpu_custom_call.1} parent=1 // pred_fallthru
      _
    // Predicated region
    $region42: #{tpu_custom_call.1} parent=1 // pred_check
      _
    $region43: #{tpu_custom_call.1} parent=1 // pred_check_branch
      %87 = sbr.rel (0) target = $region45
    $region44: #{tpu_custom_call.1} parent=1 // pred_region
      %89 = dma.done [#allocation9], 2048
    $region45: #{tpu_custom_call.1} parent=1 // pred_fallthru
      _
    %v91 = vld [vmem:[#allocation2] sm:$0xff]
    %v92 = vld [vmem:[#allocation2 + $0x8] sm:$0x3f]
    %v93 = vld [vmem:[#allocation2 + $0xe] sm:$0xff]
    %v94 = vld [vmem:[#allocation2 + $0x16] sm:$0x3f]
    %v95 = vld [vmem:[#allocation2 + $0x1c] sm:$0xff]
    %v96 = vld [vmem:[#allocation2 + $0x24] sm:$0x3f]
    %v97 = vld [vmem:[#allocation2 + $0x2a] sm:$0xff]
    %v98 = vld [vmem:[#allocation2 + $0x32] sm:$0x3f]
    %107 = vst [vmem:[#allocation1] ss:$4 sm:$0xff] %v91
    %s108 = scalar_lea.vmem [#allocation1], 1
    %109 = vst [vmem:[%s108] ss:$4 sm:$0xff] %v93
    %s110 = scalar_lea.vmem [#allocation1], 2
    %111 = vst [vmem:[%s110] ss:$4 sm:$0xff] %v95
    %s112 = scalar_lea.vmem [#allocation1], 3
    %113 = vst [vmem:[%s112] ss:$4 sm:$0xff] %v97
    %s114 = scalar_lea.vmem [#allocation1], 32
    %115 = vst [vmem:[%s114] ss:$4 sm:$0xff] %v92
    %s116 = scalar_lea.vmem [#allocation1], 33
    %117 = vst [vmem:[%s116] ss:$4 sm:$0xff] %v94
    %s118 = scalar_lea.vmem [#allocation1], 34
    %119 = vst [vmem:[%s118] ss:$4 sm:$0xff] %v96
    %s120 = scalar_lea.vmem [#allocation1], 35
    %121 = vst [vmem:[%s120] ss:$4 sm:$0xff] %v98
    %v122 = vld.sshfl [vmem:[#allocation1] sm:$0xff pattern:$0x73625140]
    %v123 = vld.sshfl [vmem:[#allocation1 + $0x8] sm:$0xff pattern:$0x73625140]
    %v124 = vld.sshfl [vmem:[#allocation1 + $0x10] sm:$0xff pattern:$0x73625140]
    %v125 = vld.sshfl [vmem:[#allocation1 + $0x18] sm:$0xff pattern:$0x73625140]
    %v126 = vld.sshfl [vmem:[#allocation1 + $0x20] sm:$0xff pattern:$0x73625140]
    %v127 = vld.sshfl [vmem:[#allocation1 + $0x28] sm:$0xff pattern:$0x73625140]
    %v128 = vld.sshfl [vmem:[#allocation1 + $0x30] sm:$0xff pattern:$0x73625140]
    %v136 = vpack.c.bf16 %v122, %v122
    %v137 = vpack.c.bf16 %v123, %v123
    %v138 = vpack.c.bf16 %v124, %v124
    %v139 = vpack.c.bf16 %v125, %v125
    %v140 = vpack.c.bf16 %v126, %v126
    %v141 = vpack.c.bf16 %v127, %v127
    %v142 = vpack.c.bf16 %v128, %v128
    %v143 = vld [vmem:[#allocation5] sm:$0xf]
    %v144 = vld [vmem:[#allocation5 + $0x4] sm:$0xf]
    %v145 = vld [vmem:[#allocation5 + $0x8] sm:$0xf]
    %v146 = vld [vmem:[#allocation5 + $0xc] sm:$0xf]
    %v147 = vld [vmem:[#allocation5 + $0x10] sm:$0xf]
    %v148 = vld [vmem:[#allocation5 + $0x14] sm:$0xf]
    %v149 = vld [vmem:[#allocation5 + $0x18] sm:$0xf]
    %v150 = vld [vmem:[#allocation5 + $0x1c] sm:$0xf]
    %v151 = vld [vmem:[#allocation5 + $0x20] sm:$0xf]
    %v152 = vld [vmem:[#allocation5 + $0x24] sm:$0xf]
    %v153 = vld [vmem:[#allocation5 + $0x28] sm:$0xf]
    %v154 = vld [vmem:[#allocation5 + $0x2c] sm:$0xf]
    %v155 = vld [vmem:[#allocation5 + $0x30] sm:$0xf]
    %v156 = vld [vmem:[#allocation5 + $0x34] sm:$0xf]
    %v157 = vld [vmem:[#allocation5 + $0x38] sm:$0xf]
    %v158 = vld [vmem:[#allocation5 + $0x3c] sm:$0xf]
    %v159 = vld [vmem:[#allocation5 + $0x40] sm:$0xf]
    %v160 = vld [vmem:[#allocation5 + $0x44] sm:$0xf]
    %v161 = vld [vmem:[#allocation5 + $0x48] sm:$0xf]
    %v162 = vld [vmem:[#allocation5 + $0x4c] sm:$0xf]
    %v163 = vld [vmem:[#allocation5 + $0x50] sm:$0xf]
    %v164 = vld [vmem:[#allocation5 + $0x54] sm:$0xf]
    %v165 = vld [vmem:[#allocation5 + $0x58] sm:$0xf]
    %v166 = vld [vmem:[#allocation5 + $0x5c] sm:$0xf]
    %v167 = vld [vmem:[#allocation5 + $0x60] sm:$0xf]
    %v168 = vld [vmem:[#allocation5 + $0x64] sm:$0xf]
    %v169 = vld [vmem:[#allocation5 + $0x68] sm:$0xf]
    %v170 = vld [vmem:[#allocation5 + $0x6c] sm:$0xf]
    %v171 = vld [vmem:[#allocation5 + $0x70] sm:$0xf]
    %v172 = vld [vmem:[#allocation5 + $0x74] sm:$0xf]
    %v173 = vld [vmem:[#allocation5 + $0x78] sm:$0xf]
    %v174 = vld [vmem:[#allocation5 + $0x7c] sm:$0xf]
    %v175 = vld [vmem:[#allocation5 + $0x80] sm:$0xf]
    %v176 = vld [vmem:[#allocation5 + $0x84] sm:$0xf]
    %v177 = vld [vmem:[#allocation5 + $0x88] sm:$0xf]
    %v178 = vld [vmem:[#allocation5 + $0x8c] sm:$0xf]
    %v179 = vld [vmem:[#allocation5 + $0x90] sm:$0xf]
    %v180 = vld [vmem:[#allocation5 + $0x94] sm:$0xf]
    %v181 = vld [vmem:[#allocation5 + $0x98] sm:$0xf]
    %v182 = vld [vmem:[#allocation5 + $0x9c] sm:$0xf]
    %v183 = vld [vmem:[#allocation5 + $0xa0] sm:$0xf]
    %v184 = vld [vmem:[#allocation5 + $0xa4] sm:$0xf]
    %v185 = vld [vmem:[#allocation5 + $0xa8] sm:$0xf]
    %v186 = vld [vmem:[#allocation5 + $0xac] sm:$0xf]
    %v187 = vld [vmem:[#allocation5 + $0xb0] sm:$0xf]
    %v188 = vld [vmem:[#allocation5 + $0xb4] sm:$0xf]
    %v189 = vld [vmem:[#allocation5 + $0xb8] sm:$0xf]
    %v190 = vld [vmem:[#allocation5 + $0xbc] sm:$0xf]
    %v191 = vld [vmem:[#allocation5 + $0xc0] sm:$0xf]
    %v192 = vld [vmem:[#allocation5 + $0xc4] sm:$0xf]
    %v193 = vld [vmem:[#allocation5 + $0xc8] sm:$0xf]
    %v194 = vld [vmem:[#allocation5 + $0xcc] sm:$0xf]
    %v195 = vld [vmem:[#allocation5 + $0xd0] sm:$0xf]
    %v196 = vld [vmem:[#allocation5 + $0xd4] sm:$0xf]
    %v197 = vld [vmem:[#allocation5 + $0xd8] sm:$0xf]
    %v198 = vld [vmem:[#allocation5 + $0xdc] sm:$0xf]
    %v199 = vld [vmem:[#allocation5 + $0xe0] sm:$0xf]
    %v200 = vld [vmem:[#allocation5 + $0xe4] sm:$0xf]
    %v201 = vld [vmem:[#allocation5 + $0xe8] sm:$0xf]
    %v202 = vld [vmem:[#allocation5 + $0xec] sm:$0xf]
    %v203 = vld [vmem:[#allocation5 + $0xf0] sm:$0xf]
    %v204 = vld [vmem:[#allocation5 + $0xf4] sm:$0xf]
    %v205 = vld [vmem:[#allocation5 + $0xf8] sm:$0xf]
    %v206 = vld [vmem:[#allocation5 + $0xfc] sm:$0xf]
    %v207 = vld [vmem:[#allocation5 + $0x100] sm:$0xf]
    %v208 = vld [vmem:[#allocation5 + $0x104] sm:$0xf]
    %v209 = vld [vmem:[#allocation5 + $0x108] sm:$0xf]
    %v210 = vld [vmem:[#allocation5 + $0x10c] sm:$0xf]
    %v211 = vld [vmem:[#allocation5 + $0x110] sm:$0xf]
    %v212 = vld [vmem:[#allocation5 + $0x114] sm:$0xf]
    %v213 = vld [vmem:[#allocation5 + $0x118] sm:$0xf]
    %v214 = vld [vmem:[#allocation5 + $0x11c] sm:$0xf]
    %v215 = vld [vmem:[#allocation5 + $0x120] sm:$0xf]
    %v216 = vld [vmem:[#allocation5 + $0x124] sm:$0xf]
    %v217 = vld [vmem:[#allocation5 + $0x128] sm:$0xf]
    %v218 = vld [vmem:[#allocation5 + $0x12c] sm:$0xf]
    %v219 = vld [vmem:[#allocation5 + $0x130] sm:$0xf]
    %v220 = vld [vmem:[#allocation5 + $0x134] sm:$0xf]
    %v221 = vld [vmem:[#allocation5 + $0x138] sm:$0xf]
    %v222 = vld [vmem:[#allocation5 + $0x13c] sm:$0xf]
    %v223 = vld [vmem:[#allocation5 + $0x140] sm:$0xf]
    %v224 = vld [vmem:[#allocation5 + $0x144] sm:$0xf]
    %v225 = vld [vmem:[#allocation5 + $0x148] sm:$0xf]
    %v226 = vld [vmem:[#allocation5 + $0x14c] sm:$0xf]
    %v227 = vld [vmem:[#allocation5 + $0x150] sm:$0xf]
    %v228 = vld [vmem:[#allocation5 + $0x154] sm:$0xf]
    %v229 = vld [vmem:[#allocation5 + $0x158] sm:$0xf]
    %v230 = vld [vmem:[#allocation5 + $0x15c] sm:$0xf]
    %v231 = vld [vmem:[#allocation5 + $0x160] sm:$0xf]
    %v232 = vld [vmem:[#allocation5 + $0x164] sm:$0xf]
    %v233 = vld [vmem:[#allocation5 + $0x168] sm:$0xf]
    %v234 = vld [vmem:[#allocation5 + $0x16c] sm:$0xf]
    %v235 = vld [vmem:[#allocation5 + $0x170] sm:$0xf]
    %v236 = vld [vmem:[#allocation5 + $0x174] sm:$0xf]
    %v237 = vld [vmem:[#allocation5 + $0x178] sm:$0xf]
    %v238 = vld [vmem:[#allocation5 + $0x17c] sm:$0xf]
    %v239 = vld [vmem:[#allocation5 + $0x180] sm:$0xf]
    %v240 = vld [vmem:[#allocation5 + $0x184] sm:$0xf]
    %v241 = vld [vmem:[%s2] sm:$0x1]
    %v243 = vperm.slane %v241, 0
    %v343 = vunpack.c.l.b16 %v143
    %v344 = vunpack.c.l.b16 %v144
    %v345 = vunpack.c.l.b16 %v145
    %v346 = vunpack.c.l.b16 %v146
    %v347 = vunpack.c.l.b16 %v147
    %v348 = vunpack.c.l.b16 %v148
    %v349 = vunpack.c.l.b16 %v149
    %v350 = vunpack.c.l.b16 %v150
    %v351 = vunpack.c.l.b16 %v151
    %v352 = vunpack.c.l.b16 %v152
    %v353 = vunpack.c.l.b16 %v153
    %v354 = vunpack.c.l.b16 %v154
    %v355 = vunpack.c.l.b16 %v155
    %v356 = vunpack.c.l.b16 %v156
    %v357 = vunpack.c.l.b16 %v157
    %v358 = vunpack.c.l.b16 %v158
    %v359 = vunpack.c.l.b16 %v159
    %v360 = vunpack.c.l.b16 %v160
    %v361 = vunpack.c.l.b16 %v161
    %v362 = vunpack.c.l.b16 %v162
    %v363 = vunpack.c.l.b16 %v163
    %v364 = vunpack.c.l.b16 %v164
    %v365 = vunpack.c.l.b16 %v165
    %v366 = vunpack.c.l.b16 %v166
    %v367 = vunpack.c.l.b16 %v167
    %v368 = vunpack.c.l.b16 %v168
    %v369 = vunpack.c.l.b16 %v169
    %v370 = vunpack.c.l.b16 %v170
    %v371 = vunpack.c.l.b16 %v171
    %v372 = vunpack.c.l.b16 %v172
    %v373 = vunpack.c.l.b16 %v173
    %v374 = vunpack.c.l.b16 %v174
    %v375 = vunpack.c.l.b16 %v175
    %v376 = vunpack.c.l.b16 %v176
    %v377 = vunpack.c.l.b16 %v177
    %v378 = vunpack.c.l.b16 %v178
    %v379 = vunpack.c.l.b16 %v179
    %v380 = vunpack.c.l.b16 %v180
    %v381 = vunpack.c.l.b16 %v181
    %v382 = vunpack.c.l.b16 %v182
    %v383 = vunpack.c.l.b16 %v183
    %v384 = vunpack.c.l.b16 %v184
    %v385 = vunpack.c.l.b16 %v185
    %v386 = vunpack.c.l.b16 %v186
    %v387 = vunpack.c.l.b16 %v187
    %v388 = vunpack.c.l.b16 %v188
    %v389 = vunpack.c.l.b16 %v189
    %v390 = vunpack.c.l.b16 %v190
    %v391 = vunpack.c.l.b16 %v191
    %v392 = vunpack.c.l.b16 %v192
    %v393 = vunpack.c.l.b16 %v193
    %v394 = vunpack.c.l.b16 %v194
    %v395 = vunpack.c.l.b16 %v195
    %v396 = vunpack.c.l.b16 %v196
    %v397 = vunpack.c.l.b16 %v197
    %v398 = vunpack.c.l.b16 %v198
    %v399 = vunpack.c.l.b16 %v199
    %v400 = vunpack.c.l.b16 %v200
    %v401 = vunpack.c.l.b16 %v201
    %v402 = vunpack.c.l.b16 %v202
    %v403 = vunpack.c.l.b16 %v203
    %v404 = vunpack.c.l.b16 %v204
    %v405 = vunpack.c.l.b16 %v205
    %v406 = vunpack.c.l.b16 %v206
    %v407 = vunpack.c.l.b16 %v207
    %v408 = vunpack.c.l.b16 %v208
    %v409 = vunpack.c.l.b16 %v209
    %v410 = vunpack.c.l.b16 %v210
    %v411 = vunpack.c.l.b16 %v211
    %v412 = vunpack.c.l.b16 %v212
    %v413 = vunpack.c.l.b16 %v213
    %v414 = vunpack.c.l.b16 %v214
    %v415 = vunpack.c.l.b16 %v215
    %v416 = vunpack.c.l.b16 %v216
    %v417 = vunpack.c.l.b16 %v217
    %v418 = vunpack.c.l.b16 %v218
    %v419 = vunpack.c.l.b16 %v219
    %v420 = vunpack.c.l.b16 %v220
    %v421 = vunpack.c.l.b16 %v221
    %v422 = vunpack.c.l.b16 %v222
    %v423 = vunpack.c.l.b16 %v223
    %v424 = vunpack.c.l.b16 %v224
    %v425 = vunpack.c.l.b16 %v225
    %v426 = vunpack.c.l.b16 %v226
    %v427 = vunpack.c.l.b16 %v227
    %v428 = vunpack.c.l.b16 %v228
    %v429 = vunpack.c.l.b16 %v229
    %v430 = vunpack.c.l.b16 %v230
    %v431 = vunpack.c.l.b16 %v231
    %v432 = vunpack.c.l.b16 %v232
    %v433 = vunpack.c.l.b16 %v233
    %v434 = vunpack.c.l.b16 %v234
    %v435 = vunpack.c.l.b16 %v235
    %v436 = vunpack.c.l.b16 %v236
    %v437 = vunpack.c.l.b16 %v237
    %v438 = vunpack.c.l.b16 %v238
    %v439 = vunpack.c.l.b16 %v239
    %v440 = vunpack.c.l.b16 %v240
    %v441 = vpack.c.b16 %v344, %v343
    %v442 = vpack.c.b16 %v346, %v345
    %v443 = vpack.c.b16 %v348, %v347
    %v444 = vpack.c.b16 %v350, %v349
    %v445 = vpack.c.b16 %v352, %v351
    %v446 = vpack.c.b16 %v354, %v353
    %v447 = vpack.c.b16 %v356, %v355
    %v448 = vpack.c.b16 %v358, %v357
    %v449 = vpack.c.b16 %v360, %v359
    %v450 = vpack.c.b16 %v362, %v361
    %v451 = vpack.c.b16 %v364, %v363
    %v452 = vpack.c.b16 %v366, %v365
    %v453 = vpack.c.b16 %v368, %v367
    %v454 = vpack.c.b16 %v370, %v369
    %v455 = vpack.c.b16 %v372, %v371
    %v456 = vpack.c.b16 %v374, %v373
    %v457 = vpack.c.b16 %v376, %v375
    %v458 = vpack.c.b16 %v378, %v377
    %v459 = vpack.c.b16 %v380, %v379
    %v460 = vpack.c.b16 %v382, %v381
    %v461 = vpack.c.b16 %v384, %v383
    %v462 = vpack.c.b16 %v386, %v385
    %v463 = vpack.c.b16 %v388, %v387
    %v464 = vpack.c.b16 %v390, %v389
    %v465 = vpack.c.b16 %v392, %v391
    %v466 = vpack.c.b16 %v394, %v393
    %v467 = vpack.c.b16 %v396, %v395
    %v468 = vpack.c.b16 %v398, %v397
    %v469 = vpack.c.b16 %v400, %v399
    %v470 = vpack.c.b16 %v402, %v401
    %v471 = vpack.c.b16 %v404, %v403
    %v472 = vpack.c.b16 %v406, %v405
    %v473 = vpack.c.b16 %v408, %v407
    %v474 = vpack.c.b16 %v410, %v409
    %v475 = vpack.c.b16 %v412, %v411
    %v476 = vpack.c.b16 %v414, %v413
    %v477 = vpack.c.b16 %v416, %v415
    %v478 = vpack.c.b16 %v418, %v417
    %v479 = vpack.c.b16 %v420, %v419
    %v480 = vpack.c.b16 %v422, %v421
    %v481 = vpack.c.b16 %v424, %v423
    %v482 = vpack.c.b16 %v426, %v425
    %v483 = vpack.c.b16 %v428, %v427
    %v484 = vpack.c.b16 %v430, %v429
    %v485 = vpack.c.b16 %v432, %v431
    %v486 = vpack.c.b16 %v434, %v433
    %v487 = vpack.c.b16 %v436, %v435
    %v488 = vpack.c.b16 %v438, %v437
    %v489 = vpack.c.b16 %v440, %v439
    %vm539 = vcmask 130048
    %v541 = vsel %vm539, %v142, 0
    %543 = vmatpush.bf16.msra.mxu0 %v448
    %544 = vmatpush.bf16.msra.mxu0 %v447
    %545 = vmatpush.bf16.msra.mxu0 %v446
    %546 = vmatpush.bf16.msra.mxu0 %v445
    %547 = vmatpush.bf16.msra.mxu0 %v444
    %548 = vmatpush.bf16.msra.mxu0 %v443
    %549 = vmatpush.bf16.msra.mxu0 %v442
    %550 = vmatpush.bf16.msra.mxu0 %v441
    %551 = vmatmul.bf16.gmra.mxu0 %v136
    %v552 = vpop.f32.mrf.mxu0
    %v553 = vadd.f32 %v243, %v552
    %v554 = vpop.f32.mrf.mxu0
    %555 = vdwg.mxu0
    %556 = vmatpush.bf16.msra.mxu0 %v456
    %557 = vmatpush.bf16.msra.mxu0 %v455
    %558 = vmatpush.bf16.msra.mxu0 %v454
    %559 = vmatpush.bf16.msra.mxu0 %v453
    %560 = vmatpush.bf16.msra.mxu0 %v452
    %561 = vmatpush.bf16.msra.mxu0 %v451
    %562 = vmatpush.bf16.msra.mxu0 %v450
    %563 = vmatpush.bf16.msra.mxu0 %v449
    %564 = vmatmul.bf16.gmra.mxu0 %v137
    %v565 = vpop.f32.mrf.mxu0
    %v566 = vadd.f32 %v553, %v565
    %v567 = vpop.f32.mrf.mxu0
    %568 = vdwg.mxu0
    %569 = vmatpush.bf16.msra.mxu0 %v464
    %570 = vmatpush.bf16.msra.mxu0 %v463
    %571 = vmatpush.bf16.msra.mxu0 %v462
    %572 = vmatpush.bf16.msra.mxu0 %v461
    %573 = vmatpush.bf16.msra.mxu0 %v460
    %574 = vmatpush.bf16.msra.mxu0 %v459
    %575 = vmatpush.bf16.msra.mxu0 %v458
    %576 = vmatpush.bf16.msra.mxu0 %v457
    %577 = vmatmul.bf16.gmra.mxu0 %v138
    %v578 = vpop.f32.mrf.mxu0
    %v579 = vadd.f32 %v566, %v578
    %v580 = vpop.f32.mrf.mxu0
    %581 = vdwg.mxu0
    %582 = vmatpush.bf16.msra.mxu0 %v472
    %583 = vmatpush.bf16.msra.mxu0 %v471
    %584 = vmatpush.bf16.msra.mxu0 %v470
    %585 = vmatpush.bf16.msra.mxu0 %v469
    %586 = vmatpush.bf16.msra.mxu0 %v468
    %587 = vmatpush.bf16.msra.mxu0 %v467
    %588 = vmatpush.bf16.msra.mxu0 %v466
    %589 = vmatpush.bf16.msra.mxu0 %v465
    %590 = vmatmul.bf16.gmra.mxu0 %v139
    %v591 = vpop.f32.mrf.mxu0
    %v592 = vadd.f32 %v579, %v591
    %v593 = vpop.f32.mrf.mxu0
    %594 = vdwg.mxu0
    %595 = vmatpush.bf16.msra.mxu0 %v480
    %596 = vmatpush.bf16.msra.mxu0 %v479
    %597 = vmatpush.bf16.msra.mxu0 %v478
    %598 = vmatpush.bf16.msra.mxu0 %v477
    %599 = vmatpush.bf16.msra.mxu0 %v476
    %600 = vmatpush.bf16.msra.mxu0 %v475
    %601 = vmatpush.bf16.msra.mxu0 %v474
    %602 = vmatpush.bf16.msra.mxu0 %v473
    %603 = vmatmul.bf16.gmra.mxu0 %v140
    %v604 = vpop.f32.mrf.mxu0
    %v605 = vadd.f32 %v592, %v604
    %v606 = vpop.f32.mrf.mxu0
    %607 = vdwg.mxu0
    %608 = vmatpush.bf16.msra.mxu0 %v488
    %609 = vmatpush.bf16.msra.mxu0 %v487
    %610 = vmatpush.bf16.msra.mxu0 %v486
    %611 = vmatpush.bf16.msra.mxu0 %v485
    %612 = vmatpush.bf16.msra.mxu0 %v484
    %613 = vmatpush.bf16.msra.mxu0 %v483
    %614 = vmatpush.bf16.msra.mxu0 %v482
    %615 = vmatpush.bf16.msra.mxu0 %v481
    %616 = vmatmul.bf16.gmra.mxu0 %v141
    %v617 = vpop.f32.mrf.mxu0
    %v618 = vadd.f32 %v605, %v617
    %v619 = vpop.f32.mrf.mxu0
    %620 = vdwg.mxu0
    %621 = vmatpush.bf16.msra.mxu0 0
    %622 = vmatpush.bf16.msra.mxu0 0
    %623 = vmatpush.bf16.msra.mxu0 0
    %624 = vmatpush.bf16.msra.mxu0 0
    %625 = vmatpush.bf16.msra.mxu0 0
    %626 = vmatpush.bf16.msra.mxu0 0
    %627 = vmatpush.bf16.msra.mxu0 0
    %628 = vmatpush.bf16.msra.mxu0 %v489
    %629 = vmatmul.bf16.gmra.mxu0 %v541
    %v630 = vpop.f32.mrf.mxu0
    %v631 = vadd.f32 %v618, %v630
    %v632 = vpop.f32.mrf.mxu0
    %633 = vdwg.mxu0
    %v634 = vmax.f32 %v631, 0.0
    %v635 = vpack.c.bf16 %v634, %v634
    %v636 = vld [vmem:[#allocation7] sm:$0xff]
    %v637 = vld [vmem:[#allocation7 + $0x8] sm:$0xff]
    %v638 = vld [vmem:[#allocation7 + $0x10] sm:$0xff]
    %v639 = vld [vmem:[#allocation7 + $0x18] sm:$0xff]
    %v640 = vld [vmem:[#allocation7 + $0x20] sm:$0xff]
    %v641 = vld [vmem:[#allocation7 + $0x28] sm:$0xff]
    %v642 = vld [vmem:[#allocation7 + $0x30] sm:$0xff]
    %v643 = vld [vmem:[#allocation7 + $0x38] sm:$0xff]
    %v644 = vld [vmem:[#allocation7 + $0x40] sm:$0xff]
    %v645 = vld [vmem:[#allocation7 + $0x48] sm:$0xff]
    %v646 = vld [vmem:[#allocation7 + $0x50] sm:$0xff]
    %v647 = vld [vmem:[#allocation7 + $0x58] sm:$0xff]
    %v648 = vld [vmem:[#allocation7 + $0x60] sm:$0xff]
    %v649 = vld [vmem:[#allocation7 + $0x68] sm:$0xff]
    %v650 = vld [vmem:[#allocation7 + $0x70] sm:$0xff]
    %v651 = vld [vmem:[#allocation7 + $0x78] sm:$0xff]
    %v652 = vld [vmem:[%s4] sm:$0x3]
    %v654 = vperm.slane %v652, 0
    %v655 = vperm.slane %v652, 1
    %v674 = vunpack.c.l.b16 %v636
    %v675 = vunpack.c.h.b16 %v636
    %v676 = vunpack.c.l.b16 %v637
    %v677 = vunpack.c.h.b16 %v637
    %v678 = vunpack.c.l.b16 %v638
    %v679 = vunpack.c.h.b16 %v638
    %v680 = vunpack.c.l.b16 %v639
    %v681 = vunpack.c.h.b16 %v639
    %v682 = vunpack.c.l.b16 %v640
    %v683 = vunpack.c.h.b16 %v640
    %v684 = vunpack.c.l.b16 %v641
    %v685 = vunpack.c.h.b16 %v641
    %v686 = vunpack.c.l.b16 %v642
    %v687 = vunpack.c.h.b16 %v642
    %v688 = vunpack.c.l.b16 %v643
    %v689 = vunpack.c.h.b16 %v643
    %v690 = vunpack.c.l.b16 %v644
    %v691 = vunpack.c.h.b16 %v644
    %v692 = vunpack.c.l.b16 %v645
    %v693 = vunpack.c.h.b16 %v645
    %v694 = vunpack.c.l.b16 %v646
    %v695 = vunpack.c.h.b16 %v646
    %v696 = vunpack.c.l.b16 %v647
    %v697 = vunpack.c.h.b16 %v647
    %v698 = vunpack.c.l.b16 %v648
    %v699 = vunpack.c.h.b16 %v648
    %v700 = vunpack.c.l.b16 %v649
    %v701 = vunpack.c.h.b16 %v649
    %v702 = vunpack.c.l.b16 %v650
    %v703 = vunpack.c.h.b16 %v650
    %v704 = vunpack.c.l.b16 %v651
    %v705 = vunpack.c.h.b16 %v651
    %v706 = vpack.c.b16 %v676, %v674
    %v707 = vpack.c.b16 %v677, %v675
    %v708 = vpack.c.b16 %v680, %v678
    %v709 = vpack.c.b16 %v681, %v679
    %v710 = vpack.c.b16 %v684, %v682
    %v711 = vpack.c.b16 %v685, %v683
    %v712 = vpack.c.b16 %v688, %v686
    %v713 = vpack.c.b16 %v689, %v687
    %v714 = vpack.c.b16 %v692, %v690
    %v715 = vpack.c.b16 %v693, %v691
    %v716 = vpack.c.b16 %v696, %v694
    %v717 = vpack.c.b16 %v697, %v695
    %v718 = vpack.c.b16 %v700, %v698
    %v719 = vpack.c.b16 %v701, %v699
    %v720 = vpack.c.b16 %v704, %v702
    %v721 = vpack.c.b16 %v705, %v703
    %738 = vmatpush.bf16.msra.mxu0 %v720
    %739 = vmatpush.bf16.msra.mxu0 %v718
    %740 = vmatpush.bf16.msra.mxu0 %v716
    %741 = vmatpush.bf16.msra.mxu0 %v714
    %742 = vmatpush.bf16.msra.mxu0 %v712
    %743 = vmatpush.bf16.msra.mxu0 %v710
    %744 = vmatpush.bf16.msra.mxu0 %v708
    %745 = vmatpush.bf16.msra.mxu0 %v706
    %746 = vmatmul.bf16.gmra.mxu0 %v635
    %v747 = vpop.f32.mrf.mxu0
    %v748 = vadd.f32 %v654, %v747
    %v749 = vpop.f32.mrf.mxu0
    %750 = vdwg.mxu0
    %751 = vmatpush.bf16.msra.mxu0 %v721
    %752 = vmatpush.bf16.msra.mxu0 %v719
    %753 = vmatpush.bf16.msra.mxu0 %v717
    %754 = vmatpush.bf16.msra.mxu0 %v715
    %755 = vmatpush.bf16.msra.mxu0 %v713
    %756 = vmatpush.bf16.msra.mxu0 %v711
    %757 = vmatpush.bf16.msra.mxu0 %v709
    %758 = vmatpush.bf16.msra.mxu0 %v707
    %759 = vmatmul.bf16.gmra.mxu0 %v635
    %v760 = vpop.f32.mrf.mxu0
    %v761 = vadd.f32 %v655, %v760
    %v762 = vpop.f32.mrf.mxu0
    %763 = vdwg.mxu0
    %v764 = vmax.f32 %v748, 0.0
    %v765 = vmax.f32 %v761, 0.0
    %v766 = vpack.c.bf16 %v764, %v764
    %v767 = vpack.c.bf16 %v765, %v765
    %v768 = vld [vmem:[#allocation8] sm:$0xf]
    %v769 = vld [vmem:[#allocation8 + $0x4] sm:$0xf]
    %v770 = vld [vmem:[#allocation8 + $0x8] sm:$0xf]
    %v771 = vld [vmem:[#allocation8 + $0xc] sm:$0xf]
    %v772 = vld [vmem:[#allocation8 + $0x10] sm:$0xf]
    %v773 = vld [vmem:[#allocation8 + $0x14] sm:$0xf]
    %v774 = vld [vmem:[#allocation8 + $0x18] sm:$0xf]
    %v775 = vld [vmem:[#allocation8 + $0x1c] sm:$0xf]
    %v776 = vld [vmem:[#allocation8 + $0x20] sm:$0xf]
    %v777 = vld [vmem:[#allocation8 + $0x24] sm:$0xf]
    %v778 = vld [vmem:[#allocation8 + $0x28] sm:$0xf]
    %v779 = vld [vmem:[#allocation8 + $0x2c] sm:$0xf]
    %v780 = vld [vmem:[#allocation8 + $0x30] sm:$0xf]
    %v781 = vld [vmem:[#allocation8 + $0x34] sm:$0xf]
    %v782 = vld [vmem:[#allocation8 + $0x38] sm:$0xf]
    %v783 = vld [vmem:[#allocation8 + $0x3c] sm:$0xf]
    %v784 = vld [vmem:[#allocation8 + $0x40] sm:$0xf]
    %v785 = vld [vmem:[#allocation8 + $0x44] sm:$0xf]
    %v786 = vld [vmem:[#allocation8 + $0x48] sm:$0xf]
    %v787 = vld [vmem:[#allocation8 + $0x4c] sm:$0xf]
    %v788 = vld [vmem:[#allocation8 + $0x50] sm:$0xf]
    %v789 = vld [vmem:[#allocation8 + $0x54] sm:$0xf]
    %v790 = vld [vmem:[#allocation8 + $0x58] sm:$0xf]
    %v791 = vld [vmem:[#allocation8 + $0x5c] sm:$0xf]
    %v792 = vld [vmem:[#allocation8 + $0x60] sm:$0xf]
    %v793 = vld [vmem:[#allocation8 + $0x64] sm:$0xf]
    %v794 = vld [vmem:[#allocation8 + $0x68] sm:$0xf]
    %v795 = vld [vmem:[#allocation8 + $0x6c] sm:$0xf]
    %v796 = vld [vmem:[#allocation8 + $0x70] sm:$0xf]
    %v797 = vld [vmem:[#allocation8 + $0x74] sm:$0xf]
    %v798 = vld [vmem:[#allocation8 + $0x78] sm:$0xf]
    %v799 = vld [vmem:[#allocation8 + $0x7c] sm:$0xf]
    %v800 = vld [vmem:[%s6] sm:$0x1]
    %v802 = vperm.slane %v800, 0
    %v836 = vunpack.c.l.b16 %v768
    %v837 = vunpack.c.l.b16 %v769
    %v838 = vunpack.c.l.b16 %v770
    %v839 = vunpack.c.l.b16 %v771
    %v840 = vunpack.c.l.b16 %v772
    %v841 = vunpack.c.l.b16 %v773
    %v842 = vunpack.c.l.b16 %v774
    %v843 = vunpack.c.l.b16 %v775
    %v844 = vunpack.c.l.b16 %v776
    %v845 = vunpack.c.l.b16 %v777
    %v846 = vunpack.c.l.b16 %v778
    %v847 = vunpack.c.l.b16 %v779
    %v848 = vunpack.c.l.b16 %v780
    %v849 = vunpack.c.l.b16 %v781
    %v850 = vunpack.c.l.b16 %v782
    %v851 = vunpack.c.l.b16 %v783
    %v852 = vunpack.c.l.b16 %v784
    %v853 = vunpack.c.l.b16 %v785
    %v854 = vunpack.c.l.b16 %v786
    %v855 = vunpack.c.l.b16 %v787
    %v856 = vunpack.c.l.b16 %v788
    %v857 = vunpack.c.l.b16 %v789
    %v858 = vunpack.c.l.b16 %v790
    %v859 = vunpack.c.l.b16 %v791
    %v860 = vunpack.c.l.b16 %v792
    %v861 = vunpack.c.l.b16 %v793
    %v862 = vunpack.c.l.b16 %v794
    %v863 = vunpack.c.l.b16 %v795
    %v864 = vunpack.c.l.b16 %v796
    %v865 = vunpack.c.l.b16 %v797
    %v866 = vunpack.c.l.b16 %v798
    %v867 = vunpack.c.l.b16 %v799
    %v868 = vpack.c.b16 %v837, %v836
    %v869 = vpack.c.b16 %v839, %v838
    %v870 = vpack.c.b16 %v841, %v840
    %v871 = vpack.c.b16 %v843, %v842
    %v872 = vpack.c.b16 %v845, %v844
    %v873 = vpack.c.b16 %v847, %v846
    %v874 = vpack.c.b16 %v849, %v848
    %v875 = vpack.c.b16 %v851, %v850
    %v876 = vpack.c.b16 %v853, %v852
    %v877 = vpack.c.b16 %v855, %v854
    %v878 = vpack.c.b16 %v857, %v856
    %v879 = vpack.c.b16 %v859, %v858
    %v880 = vpack.c.b16 %v861, %v860
    %v881 = vpack.c.b16 %v863, %v862
    %v882 = vpack.c.b16 %v865, %v864
    %v883 = vpack.c.b16 %v867, %v866
    %900 = vmatpush.bf16.msra.mxu0 %v875
    %901 = vmatpush.bf16.msra.mxu0 %v874
    %902 = vmatpush.bf16.msra.mxu0 %v873
    %903 = vmatpush.bf16.msra.mxu0 %v872
    %904 = vmatpush.bf16.msra.mxu0 %v871
    %905 = vmatpush.bf16.msra.mxu0 %v870
    %906 = vmatpush.bf16.msra.mxu0 %v869
    %907 = vmatpush.bf16.msra.mxu0 %v868
    %908 = vmatmul.bf16.gmra.mxu0 %v766
    %v909 = vpop.f32.mrf.mxu0
    %v910 = vadd.f32 %v802, %v909
    %v911 = vpop.f32.mrf.mxu0
    %912 = vdwg.mxu0
    %913 = vmatpush.bf16.msra.mxu0 %v883
    %914 = vmatpush.bf16.msra.mxu0 %v882
    %915 = vmatpush.bf16.msra.mxu0 %v881
    %916 = vmatpush.bf16.msra.mxu0 %v880
    %917 = vmatpush.bf16.msra.mxu0 %v879
    %918 = vmatpush.bf16.msra.mxu0 %v878
    %919 = vmatpush.bf16.msra.mxu0 %v877
    %920 = vmatpush.bf16.msra.mxu0 %v876
    %921 = vmatmul.bf16.gmra.mxu0 %v767
    %v922 = vpop.f32.mrf.mxu0
    %v923 = vadd.f32 %v910, %v922
    %v924 = vpop.f32.mrf.mxu0
    %925 = vdwg.mxu0
    %926 = vmax.xlane.f32.xlu0 %v923
    %v927 = vpop.xlane.xlu0 %926
    %v928 = vsub.f32 %v923, %v927
    %v929 = vmul.f32 %v928, 1.442695
    %v930 = vpow.pop %v929
    %931 = vadd.xlane.f32.xlu0 %v930
    %v932 = vpop.xlane.xlu0 %931
    %v933 = vlog2.pop %v932
    %v934 = vmul.f32 %v933, 0.6931472
    %v935 = vsub.f32 %v928, %v934
    %v936 = vpack.c.bf16 %v935, %v935
    %v938 = vrot.slane %v936, 3
    %vm939 = vcmask 1040384
    %v942 = vsel %vm939, %v936, %v938
    %vm943 = vcmask 1041409
    %v944 = vsel %vm943, %v936, %v938
    %v946 = vrot.slane %v944, 1
    %vm947 = vcmask 1042434
    %v948 = vsel %vm947, %v936, %v938
    %v950 = vrot.slane %v948, 2
    %vm951 = vcmask 1043459
    %v952 = vsel %vm951, %v936, %v938
    %v954 = vrot.slane %v952, 3
    %959 = vst [vmem:[#allocation10] sm:$0x1] %v942
    %960 = vst [vmem:[#allocation10 + $0x1] sm:$0x1] %v946
    %961 = vst [vmem:[#allocation10 + $0x2] sm:$0x1] %v950
    %962 = vst [vmem:[#allocation10 + $0x3] sm:$0x1] %v954
    // Predicated region
    $region46: #{tpu_custom_call.1} parent=1 // pred_check
      _
    $region47: #{tpu_custom_call.1} parent=1 // pred_check_branch
      %964 = sbr.rel (0) target = $region49
    $region48: #{tpu_custom_call.1} parent=1 // pred_region
      %966 = vsyncadd [#allocation4], 48
      %s967 = sshll.u32 [#allocation10], 4
      %s968 = int_to_ptr.vmem [resolvable:$true] %s967
      %s969 = sshll.u32 %s7, 4
      %s970 = int_to_ptr.hbm [resolvable:$true] %s969
      %975 = dma.vmem_to_hbm [thread:$0]  %s968, 16, %s970, [#allocation4], 16, 16, 1
    $region49: #{tpu_custom_call.1} parent=1 // pred_fallthru
      _
    // Predicated region
    $region50: #{tpu_custom_call.1} parent=1 // pred_check
      _
    $region51: #{tpu_custom_call.1} parent=1 // pred_check_branch
      %977 = sbr.rel (0) target = $region53
    $region52: #{tpu_custom_call.1} parent=1 // pred_region
      %979 = dma.done [#allocation4], 64
    $region53: #{tpu_custom_call.1} parent=1 // pred_fallthru
      _
    %980 = vsyncpa [#allocation3], 1
    %981 = vsyncpa [#allocation6], 1
    %982 = vsyncpa [#allocation9], 1
    %983 = vsyncpa [#allocation4], 1

</llo_original>
